<compile_context>
chip_gen: v7x
topology: tpu7x:2x2x1
jax: 0.10.0
libtpu: 0.0.40
codegen_flags: <defaults>
</compile_context>

<pallas_src>
import jax
import jax.numpy as jnp
from jax import lax
from jax.experimental import pallas as pl
from jax.experimental.pallas import tpu as pltpu

K = 300       # word embedding dim (hardcoded in the PyTorch module)
L = 128       # encoder dim (hardcoded in the PyTorch module)
EPS = 1e-6    # CosineSimilarity eps
C_PAD = 128   # lane-padded class dim of the kernel output
_TB_MAX = 40  # batch tile: (1+C)*TB ~ 240-row LHS for C=5 (v6e/v7x MXU); multiple of 8


def _round_up(x, m):
    return ((x + m - 1) // m) * m


def zerodnn_kernel(uid_ref, iid_ref, emb_ref, wcat_ref, bias_ref, out_ref):
    """One grid step = one tile of TB batch elements.

    uid_ref : (TB*S, 1)       int32  utterance token ids (batch-major, seq within batch)
    iid_ref : (TB*C, 1)       int32  intent token ids, CLASS-major within the tile
    emb_ref : (V_PAD, K_PAD)  bf16   zero-padded embedding table (VMEM resident)
    wcat_ref: (K_PAD, 2L)     bf16   [linear.weight^T | in_linear.weight^T]
    bias_ref: (1, L)          f32    linear.bias
    out_ref : (TB, C_PAD)     f32    softmax probs in lanes [0, C); zeros elsewhere
    """
    TB, c_pad = out_ref.shape
    S = uid_ref.shape[0] // TB
    C = iid_ref.shape[0] // TB
    V_PAD = emb_ref.shape[0]
    Lw = bias_ref.shape[1]
    f32 = jnp.float32

    # ---- one-hot rows: a single broadcasted compare each (no per-token unrolling) ----
    oh_u = (uid_ref[...] ==
            lax.broadcasted_iota(jnp.int32, (TB * S, V_PAD), 1)).astype(f32)   # (TB*S, V_PAD)
    sel_i = (iid_ref[...] ==
             lax.broadcasted_iota(jnp.int32, (TB * C, V_PAD), 1)).astype(f32)  # (TB*C, V_PAD)

    # ---- fold the 1/S sequence-mean into a tiny combine matmul (keeps everything 2D) ----
    row = lax.broadcasted_iota(jnp.int32, (TB, TB * S), 0)
    col = lax.broadcasted_iota(jnp.int32, (TB, TB * S), 1)
    mean_mat = ((col >= row * S) & (col < row * S + S)).astype(f32) * (1.0 / S)  # (TB, TB*S)
    sel_u = jnp.dot(mean_mat, oh_u, preferred_element_type=f32)                  # (TB, V_PAD)

    # ---- gather + fused 2L-wide projection: two matmuls with a tall (1+C)*TB-row LHS ----
    sel = jnp.concatenate([sel_u, sel_i], axis=0).astype(emb_ref.dtype)     # ((1+C)*TB, V_PAD)
    x = jnp.dot(sel, emb_ref[...], preferred_element_type=f32)              # ((1+C)*TB, K_PAD)
    z = jnp.dot(x.astype(wcat_ref.dtype), wcat_ref[...],
                preferred_element_type=f32)                                 # ((1+C)*TB, 2L)

    u = jnp.tanh(z[0:TB, 0:Lw] + bias_ref[...])                             # (TB, L)
    un2 = jnp.sum(u * u, axis=-1, keepdims=True)                            # (TB, 1)

    # ---- cosine similarity per class (class-major rows -> aligned static slices) ----
    # Note: clamps ||u||*||v|| >= eps (torch clamps each norm separately); identical
    # for non-degenerate activations.
    sims = []
    for c in range(C):
        v_c = jnp.tanh(z[TB + c * TB:TB + (c + 1) * TB, Lw:2 * Lw])         # (TB, L)
        dot_c = jnp.sum(u * v_c, axis=-1, keepdims=True)                    # (TB, 1)
        vn2_c = jnp.sum(v_c * v_c, axis=-1, keepdims=True)                  # (TB, 1)
        sims.append(dot_c * lax.rsqrt(jnp.maximum(un2 * vn2_c, EPS * EPS)))

    # ---- numerically-stable softmax over classes (exact reciprocal) ----
    m = sims[0]
    for c in range(1, C):
        m = jnp.maximum(m, sims[c])
    es = [jnp.exp(s - m) for s in sims]
    tot = es[0]
    for c in range(1, C):
        tot = tot + es[c]
    inv = 1.0 / tot                                                         # (TB, 1)

    # ---- lane-dense output block: full (TB, 128) slab, probs in the first C lanes ----
    out_ref[...] = jnp.zeros((TB, c_pad), f32)
    for c in range(C):
        out_ref[:, c:c + 1] = es[c] * inv


def prepare_params(embedding, w, b, w_in):
    """One-time parameter preprocessing (hoisted out of the per-call path).

    embedding: (VOCAB, K) f32, w: (L, K) f32 (linear.weight), b: (L,) f32,
    w_in: (L, K) f32 (in_linear.weight).
    Returns bf16 zero-padded table (V_PAD, K_PAD), bf16 fused weight (K_PAD, 2L),
    f32 bias (1, L).  Zero padding keeps the matmuls exact.
    """
    vocab, k = embedding.shape
    l = w.shape[0]
    v_pad = _round_up(vocab, 128)
    k_pad = _round_up(k, 128)
    emb_pad = jnp.zeros((v_pad, k_pad), jnp.bfloat16)
    emb_pad = emb_pad.at[:vocab, :k].set(embedding.astype(jnp.bfloat16))
    w_cat = jnp.zeros((k_pad, 2 * l), jnp.bfloat16)
    w_cat = w_cat.at[:k, :l].set(w.T.astype(jnp.bfloat16))
    w_cat = w_cat.at[:k, l:].set(w_in.T.astype(jnp.bfloat16))
    b_row = b.reshape(1, l).astype(jnp.float32)
    return emb_pad, w_cat, b_row


@jax.jit
def zerodnn_forward(utter_ids, intent_ids, emb_pad, w_cat, b_row):
    """Per-call path: id layout prep + a single batch-tiled pallas_call."""
    B, S = utter_ids.shape
    _, C = intent_ids.shape

    # Batch tile (multiple of 8 so every sublane slice / concat offset stays aligned).
    TB = min(_TB_MAX, _round_up(B, 8))
    B_pad = _round_up(B, TB)
    nsteps = B_pad // TB

    uids = utter_ids.astype(jnp.int32)
    iids = intent_ids.astype(jnp.int32)
    if B_pad != B:
        uids = jnp.pad(uids, ((0, B_pad - B), (0, 0)))   # pad with id 0 (valid row, sliced off)
        iids = jnp.pad(iids, ((0, B_pad - B), (0, 0)))

    # Utterance ids: flat column, batch-major then seq -> block rows are contiguous per tile.
    u_col = uids.reshape(B_pad * S, 1)
    # Intent ids: class-major WITHIN each tile -> row = step*(C*TB) + c*TB + t, so the
    # kernel can take aligned static per-class row slices.
    i_cm = iids.reshape(nsteps, TB, C).transpose(0, 2, 1).reshape(B_pad * C, 1)

    grid_spec = pltpu.PrefetchScalarGridSpec(
        num_scalar_prefetch=0,
        grid=(nsteps,),
        in_specs=[
            pl.BlockSpec((TB * S, 1), lambda i: (i, 0)),
            pl.BlockSpec((TB * C, 1), lambda i: (i, 0)),
            pl.BlockSpec(emb_pad.shape, lambda i: (0, 0)),   # resident across the grid
            pl.BlockSpec(w_cat.shape, lambda i: (0, 0)),
            pl.BlockSpec(b_row.shape, lambda i: (0, 0)),
        ],
        out_specs=pl.BlockSpec((TB, C_PAD), lambda i: (i, 0)),
    )
    out = pl.pallas_call(
        zerodnn_kernel,
        out_shape=jax.ShapeDtypeStruct((B_pad, C_PAD), jnp.float32),
        grid_spec=grid_spec,
        compiler_params=pltpu.CompilerParams(
            dimension_semantics=("parallel",),            # megacore sharding over batch tiles
            vmem_limit_bytes=32 * 1024 * 1024,            # headroom if the table grows
        ),
    )(u_col, i_cm, emb_pad, w_cat, b_row)
    return out[:B, :C]


def zerodnn_reference(utter_ids, intent_ids, embedding, w, b, w_in):
    """Pure-JAX reference of the PyTorch forward pass (f32)."""
    utter_emb = embedding[utter_ids]                           # (B, S, K)
    intent_emb = embedding[intent_ids]                         # (B, C, K)
    utter_mean = jnp.mean(utter_emb, axis=1)                   # (B, K)
    u = jnp.tanh(utter_mean @ w.T + b)                         # (B, L)
    v = jnp.tanh(jnp.einsum("bck,lk->bcl", intent_emb, w_in))  # (B, C, L)
    dots = jnp.einsum("bl,bcl->bc", u, v)
    denom = jnp.maximum(
        jnp.linalg.norm(u, axis=-1)[:, None] * jnp.linalg.norm(v, axis=-1), EPS)
    return jax.nn.softmax(dots / denom, axis=-1)


if __name__ == "__main__":
    # config: s_cnum=3, u_cnum=2 -> C=5 classes; st_len=8; batch_size=2
    B, S, C, VOCAB = 2, 8, 5, 50

    key = jax.random.PRNGKey(0)
    k_emb, k_u, k_i, k_w, k_b, k_win = jax.random.split(key, 6)

    embedding = jax.random.normal(k_emb, (VOCAB, K), dtype=jnp.float32)
    utter_ids = jax.random.randint(k_u, (B, S), 0, VOCAB, dtype=jnp.int32)
    intent_ids = jax.random.randint(k_i, (B, C), 0, VOCAB, dtype=jnp.int32)

    # nn.Linear-style init: U(-1/sqrt(K), 1/sqrt(K))
    bound = 1.0 / (K ** 0.5)
    w = jax.random.uniform(k_w, (L, K), jnp.float32, -bound, bound)       # linear.weight
    b = jax.random.uniform(k_b, (L,), jnp.float32, -bound, bound)         # linear.bias
    w_in = jax.random.uniform(k_win, (L, K), jnp.float32, -bound, bound)  # in_linear.weight

    # One-time parameter prep (transpose / pad / bf16 cast hoisted out of the hot path).
    emb_pad, w_cat, b_row = prepare_params(embedding, w, b, w_in)

    y_pred = zerodnn_forward(utter_ids, intent_ids, emb_pad, w_cat, b_row)
    y_pred = jax.block_until_ready(y_pred)

    y_ref = zerodnn_reference(utter_ids, intent_ids, embedding, w, b, w_in)
    assert y_pred.shape == (B, C)
    err = float(jnp.max(jnp.abs(y_pred - y_ref)))
    assert err < 2e-2, f"mismatch vs reference: {err}"

    print("KERNEL_OK")
</pallas_src>

<mosaic_0001>
module attributes {stable_mosaic.version = 11 : i64} {
  func.func @zerodnn_kernel(%arg0: i32, %arg1: memref<64x1xi32, #tpu.memory_space<vmem>>, %arg2: memref<40x1xi32, #tpu.memory_space<vmem>>, %arg3: memref<128x384xbf16, #tpu.memory_space<vmem>>, %arg4: memref<384x256xbf16, #tpu.memory_space<vmem>>, %arg5: memref<1x128xf32, #tpu.memory_space<vmem>>, %arg6: memref<8x128xf32, #tpu.memory_space<vmem>>) attributes {dimension_semantics = [#tpu.dimension_semantics<parallel>], iteration_bounds = array<i64: 1>, scalar_prefetch = 0 : i64, scratch_operands = 0 : i64, tpu.core_type = #tpu.core_type<tc>, window_params = [{transform_indices = @transform_0, window_bounds = array<i64: 64, 1>}, {transform_indices = @transform_1, window_bounds = array<i64: 40, 1>}, {pipeline_mode = #tpu.pipeline_mode<synchronous>, transform_indices = @transform_2, window_bounds = array<i64: 128, 384>}, {pipeline_mode = #tpu.pipeline_mode<synchronous>, transform_indices = @transform_3, window_bounds = array<i64: 384, 256>}, {pipeline_mode = #tpu.pipeline_mode<synchronous>, transform_indices = @transform_4, window_bounds = array<i64: 1, 128>}, {transform_indices = @transform_5, window_bounds = array<i64: 8, 128>}]} {
    %c0 = arith.constant 0 : index
    %c0_0 = arith.constant 0 : index
    %0 = vector.load %arg1[%c0, %c0_0] : memref<64x1xi32, #tpu.memory_space<vmem>>, vector<64x1xi32>
    %1 = tpu.iota {dimensions = array<i32: 1>} : vector<64x128xi32>
    %2 = vector.broadcast %0 : vector<64x1xi32> to vector<64x128xi32>
    %3 = arith.cmpi eq, %2, %1 : vector<64x128xi32>
    %4 = arith.extui %3 : vector<64x128xi1> to vector<64x128xi32>
    %5 = arith.sitofp %4 : vector<64x128xi32> to vector<64x128xf32>
    %c0_1 = arith.constant 0 : index
    %c0_2 = arith.constant 0 : index
    %6 = vector.load %arg2[%c0_1, %c0_2] : memref<40x1xi32, #tpu.memory_space<vmem>>, vector<40x1xi32>
    %7 = tpu.iota {dimensions = array<i32: 1>} : vector<40x128xi32>
    %8 = vector.broadcast %6 : vector<40x1xi32> to vector<40x128xi32>
    %9 = arith.cmpi eq, %8, %7 : vector<40x128xi32>
    %10 = arith.extui %9 : vector<40x128xi1> to vector<40x128xi32>
    %11 = arith.sitofp %10 : vector<40x128xi32> to vector<40x128xf32>
    %12 = tpu.iota {dimensions = array<i32: 0>} : vector<8x64xi32>
    %13 = tpu.iota {dimensions = array<i32: 1>} : vector<8x64xi32>
    %c8_i32 = arith.constant 8 : i32
    %14 = vector.broadcast %c8_i32 : i32 to vector<8x64xi32>
    %15 = arith.muli %12, %14 : vector<8x64xi32>
    %16 = arith.cmpi sge, %13, %15 : vector<8x64xi32>
    %c8_i32_3 = arith.constant 8 : i32
    %17 = vector.broadcast %c8_i32_3 : i32 to vector<8x64xi32>
    %18 = arith.muli %12, %17 : vector<8x64xi32>
    %c8_i32_4 = arith.constant 8 : i32
    %19 = vector.broadcast %c8_i32_4 : i32 to vector<8x64xi32>
    %20 = arith.addi %18, %19 : vector<8x64xi32>
    %21 = arith.cmpi slt, %13, %20 : vector<8x64xi32>
    %22 = arith.andi %16, %21 : vector<8x64xi1>
    %23 = arith.extui %22 : vector<8x64xi1> to vector<8x64xi32>
    %24 = arith.sitofp %23 : vector<8x64xi32> to vector<8x64xf32>
    %cst = arith.constant 1.250000e-01 : f32
    %25 = vector.broadcast %cst : f32 to vector<8x64xf32>
    %26 = arith.mulf %24, %25 : vector<8x64xf32>
    %cst_5 = arith.constant dense<0.000000e+00> : vector<8x128xf32>
    %27 = tpu.matmul %26, %5, %cst_5 {dimension_numbers = #tpu.dot_dimension_numbers<[1], [0], [0], [1], [0, 0, 1, 1], [], []>} : vector<8x64xf32>, vector<64x128xf32>, vector<8x128xf32> -> vector<8x128xf32>
    %28 = tpu.concatenate %27, %11 in 0 : vector<8x128xf32>, vector<40x128xf32> -> vector<48x128xf32>
    %29 = arith.truncf %28 : vector<48x128xf32> to vector<48x128xbf16>
    %c0_6 = arith.constant 0 : index
    %c0_7 = arith.constant 0 : index
    %30 = vector.load %arg3[%c0_6, %c0_7] : memref<128x384xbf16, #tpu.memory_space<vmem>>, vector<128x384xbf16>
    %cst_8 = arith.constant dense<0.000000e+00> : vector<48x384xf32>
    %31 = tpu.matmul %29, %30, %cst_8 {dimension_numbers = #tpu.dot_dimension_numbers<[1], [0], [0], [1], [0, 0, 1, 1], [], []>} : vector<48x128xbf16>, vector<128x384xbf16>, vector<48x384xf32> -> vector<48x384xf32>
    %32 = arith.truncf %31 : vector<48x384xf32> to vector<48x384xbf16>
    %c0_9 = arith.constant 0 : index
    %c0_10 = arith.constant 0 : index
    %33 = vector.load %arg4[%c0_9, %c0_10] : memref<384x256xbf16, #tpu.memory_space<vmem>>, vector<384x256xbf16>
    %cst_11 = arith.constant dense<0.000000e+00> : vector<48x256xf32>
    %34 = tpu.matmul %32, %33, %cst_11 {dimension_numbers = #tpu.dot_dimension_numbers<[1], [0], [0], [1], [0, 0, 1, 1], [], []>} : vector<48x384xbf16>, vector<384x256xbf16>, vector<48x256xf32> -> vector<48x256xf32>
    %35 = vector.extract_strided_slice %34 {offsets = [0, 0], sizes = [8, 128], strides = [1, 1]} : vector<48x256xf32> to vector<8x128xf32>
    %c0_12 = arith.constant 0 : index
    %c0_13 = arith.constant 0 : index
    %36 = vector.load %arg5[%c0_12, %c0_13] : memref<1x128xf32, #tpu.memory_space<vmem>>, vector<1x128xf32>
    %37 = vector.broadcast %36 : vector<1x128xf32> to vector<8x128xf32>
    %38 = arith.addf %35, %37 : vector<8x128xf32>
    %39 = math.tanh %38 : vector<8x128xf32>
    %40 = arith.mulf %39, %39 : vector<8x128xf32>
    %cst_14 = arith.constant dense<0.000000e+00> : vector<8xf32>
    %41 = vector.multi_reduction <add>, %40, %cst_14 [1] : vector<8x128xf32> to vector<8xf32>
    %42 = vector.shape_cast %41 : vector<8xf32> to vector<8x1xf32>
    %43 = vector.extract_strided_slice %34 {offsets = [8, 128], sizes = [8, 128], strides = [1, 1]} : vector<48x256xf32> to vector<8x128xf32>
    %44 = math.tanh %43 : vector<8x128xf32>
    %45 = arith.mulf %39, %44 : vector<8x128xf32>
    %cst_15 = arith.constant dense<0.000000e+00> : vector<8xf32>
    %46 = vector.multi_reduction <add>, %45, %cst_15 [1] : vector<8x128xf32> to vector<8xf32>
    %47 = vector.shape_cast %46 : vector<8xf32> to vector<8x1xf32>
    %48 = arith.mulf %44, %44 : vector<8x128xf32>
    %cst_16 = arith.constant dense<0.000000e+00> : vector<8xf32>
    %49 = vector.multi_reduction <add>, %48, %cst_16 [1] : vector<8x128xf32> to vector<8xf32>
    %50 = vector.shape_cast %49 : vector<8xf32> to vector<8x1xf32>
    %51 = arith.mulf %42, %50 : vector<8x1xf32>
    %cst_17 = arith.constant 9.99999996E-13 : f32
    %52 = vector.broadcast %cst_17 : f32 to vector<8x1xf32>
    %53 = arith.maximumf %51, %52 : vector<8x1xf32>
    %54 = math.rsqrt %53 : vector<8x1xf32>
    %55 = arith.mulf %47, %54 : vector<8x1xf32>
    %56 = vector.extract_strided_slice %34 {offsets = [16, 128], sizes = [8, 128], strides = [1, 1]} : vector<48x256xf32> to vector<8x128xf32>
    %57 = math.tanh %56 : vector<8x128xf32>
    %58 = arith.mulf %39, %57 : vector<8x128xf32>
    %cst_18 = arith.constant dense<0.000000e+00> : vector<8xf32>
    %59 = vector.multi_reduction <add>, %58, %cst_18 [1] : vector<8x128xf32> to vector<8xf32>
    %60 = vector.shape_cast %59 : vector<8xf32> to vector<8x1xf32>
    %61 = arith.mulf %57, %57 : vector<8x128xf32>
    %cst_19 = arith.constant dense<0.000000e+00> : vector<8xf32>
    %62 = vector.multi_reduction <add>, %61, %cst_19 [1] : vector<8x128xf32> to vector<8xf32>
    %63 = vector.shape_cast %62 : vector<8xf32> to vector<8x1xf32>
    %64 = arith.mulf %42, %63 : vector<8x1xf32>
    %cst_20 = arith.constant 9.99999996E-13 : f32
    %65 = vector.broadcast %cst_20 : f32 to vector<8x1xf32>
    %66 = arith.maximumf %64, %65 : vector<8x1xf32>
    %67 = math.rsqrt %66 : vector<8x1xf32>
    %68 = arith.mulf %60, %67 : vector<8x1xf32>
    %69 = vector.extract_strided_slice %34 {offsets = [24, 128], sizes = [8, 128], strides = [1, 1]} : vector<48x256xf32> to vector<8x128xf32>
    %70 = math.tanh %69 : vector<8x128xf32>
    %71 = arith.mulf %39, %70 : vector<8x128xf32>
    %cst_21 = arith.constant dense<0.000000e+00> : vector<8xf32>
    %72 = vector.multi_reduction <add>, %71, %cst_21 [1] : vector<8x128xf32> to vector<8xf32>
    %73 = vector.shape_cast %72 : vector<8xf32> to vector<8x1xf32>
    %74 = arith.mulf %70, %70 : vector<8x128xf32>
    %cst_22 = arith.constant dense<0.000000e+00> : vector<8xf32>
    %75 = vector.multi_reduction <add>, %74, %cst_22 [1] : vector<8x128xf32> to vector<8xf32>
    %76 = vector.shape_cast %75 : vector<8xf32> to vector<8x1xf32>
    %77 = arith.mulf %42, %76 : vector<8x1xf32>
    %cst_23 = arith.constant 9.99999996E-13 : f32
    %78 = vector.broadcast %cst_23 : f32 to vector<8x1xf32>
    %79 = arith.maximumf %77, %78 : vector<8x1xf32>
    %80 = math.rsqrt %79 : vector<8x1xf32>
    %81 = arith.mulf %73, %80 : vector<8x1xf32>
    %82 = vector.extract_strided_slice %34 {offsets = [32, 128], sizes = [8, 128], strides = [1, 1]} : vector<48x256xf32> to vector<8x128xf32>
    %83 = math.tanh %82 : vector<8x128xf32>
    %84 = arith.mulf %39, %83 : vector<8x128xf32>
    %cst_24 = arith.constant dense<0.000000e+00> : vector<8xf32>
    %85 = vector.multi_reduction <add>, %84, %cst_24 [1] : vector<8x128xf32> to vector<8xf32>
    %86 = vector.shape_cast %85 : vector<8xf32> to vector<8x1xf32>
    %87 = arith.mulf %83, %83 : vector<8x128xf32>
    %cst_25 = arith.constant dense<0.000000e+00> : vector<8xf32>
    %88 = vector.multi_reduction <add>, %87, %cst_25 [1] : vector<8x128xf32> to vector<8xf32>
    %89 = vector.shape_cast %88 : vector<8xf32> to vector<8x1xf32>
    %90 = arith.mulf %42, %89 : vector<8x1xf32>
    %cst_26 = arith.constant 9.99999996E-13 : f32
    %91 = vector.broadcast %cst_26 : f32 to vector<8x1xf32>
    %92 = arith.maximumf %90, %91 : vector<8x1xf32>
    %93 = math.rsqrt %92 : vector<8x1xf32>
    %94 = arith.mulf %86, %93 : vector<8x1xf32>
    %95 = vector.extract_strided_slice %34 {offsets = [40, 128], sizes = [8, 128], strides = [1, 1]} : vector<48x256xf32> to vector<8x128xf32>
    %96 = math.tanh %95 : vector<8x128xf32>
    %97 = arith.mulf %39, %96 : vector<8x128xf32>
    %cst_27 = arith.constant dense<0.000000e+00> : vector<8xf32>
    %98 = vector.multi_reduction <add>, %97, %cst_27 [1] : vector<8x128xf32> to vector<8xf32>
    %99 = vector.shape_cast %98 : vector<8xf32> to vector<8x1xf32>
    %100 = arith.mulf %96, %96 : vector<8x128xf32>
    %cst_28 = arith.constant dense<0.000000e+00> : vector<8xf32>
    %101 = vector.multi_reduction <add>, %100, %cst_28 [1] : vector<8x128xf32> to vector<8xf32>
    %102 = vector.shape_cast %101 : vector<8xf32> to vector<8x1xf32>
    %103 = arith.mulf %42, %102 : vector<8x1xf32>
    %cst_29 = arith.constant 9.99999996E-13 : f32
    %104 = vector.broadcast %cst_29 : f32 to vector<8x1xf32>
    %105 = arith.maximumf %103, %104 : vector<8x1xf32>
    %106 = math.rsqrt %105 : vector<8x1xf32>
    %107 = arith.mulf %99, %106 : vector<8x1xf32>
    %108 = arith.maximumf %55, %68 : vector<8x1xf32>
    %109 = arith.maximumf %108, %81 : vector<8x1xf32>
    %110 = arith.maximumf %109, %94 : vector<8x1xf32>
    %111 = arith.maximumf %110, %107 : vector<8x1xf32>
    %112 = arith.subf %55, %111 : vector<8x1xf32>
    %113 = math.exp %112 : vector<8x1xf32>
    %114 = arith.subf %68, %111 : vector<8x1xf32>
    %115 = math.exp %114 : vector<8x1xf32>
    %116 = arith.subf %81, %111 : vector<8x1xf32>
    %117 = math.exp %116 : vector<8x1xf32>
    %118 = arith.subf %94, %111 : vector<8x1xf32>
    %119 = math.exp %118 : vector<8x1xf32>
    %120 = arith.subf %107, %111 : vector<8x1xf32>
    %121 = math.exp %120 : vector<8x1xf32>
    %122 = arith.addf %113, %115 : vector<8x1xf32>
    %123 = arith.addf %122, %117 : vector<8x1xf32>
    %124 = arith.addf %123, %119 : vector<8x1xf32>
    %125 = arith.addf %124, %121 : vector<8x1xf32>
    %cst_30 = arith.constant 1.000000e+00 : f32
    %126 = vector.broadcast %cst_30 : f32 to vector<8x1xf32>
    %127 = arith.divf %126, %125 : vector<8x1xf32>
    %cst_31 = arith.constant 0.000000e+00 : f32
    %128 = vector.broadcast %cst_31 : f32 to vector<8x128xf32>
    %c0_32 = arith.constant 0 : index
    %c0_33 = arith.constant 0 : index
    %129 = vector.load %arg6[%c0_32, %c0_33] : memref<8x128xf32, #tpu.memory_space<vmem>>, vector<8x128xf32>
    tpu.vector_store %arg6[%c0_32, %c0_33], %128 {strides = array<i32>} : memref<8x128xf32, #tpu.memory_space<vmem>>, vector<8x128xf32>,
    %130 = arith.mulf %113, %127 : vector<8x1xf32>
    %c0_34 = arith.constant 0 : index
    %c0_35 = arith.constant 0 : index
    %131 = vector.load %arg6[%c0_34, %c0_35] : memref<8x128xf32, #tpu.memory_space<vmem>>, vector<8x1xf32>
    tpu.vector_store %arg6[%c0_34, %c0_35], %130 {strides = array<i32>} : memref<8x128xf32, #tpu.memory_space<vmem>>, vector<8x1xf32>,
    %132 = arith.mulf %115, %127 : vector<8x1xf32>
    %c0_36 = arith.constant 0 : index
    %c1 = arith.constant 1 : index
    %133 = vector.load %arg6[%c0_36, %c1] : memref<8x128xf32, #tpu.memory_space<vmem>>, vector<8x1xf32>
    tpu.vector_store %arg6[%c0_36, %c1], %132 {strides = array<i32>} : memref<8x128xf32, #tpu.memory_space<vmem>>, vector<8x1xf32>,
    %134 = arith.mulf %117, %127 : vector<8x1xf32>
    %c0_37 = arith.constant 0 : index
    %c2 = arith.constant 2 : index
    %135 = vector.load %arg6[%c0_37, %c2] : memref<8x128xf32, #tpu.memory_space<vmem>>, vector<8x1xf32>
    tpu.vector_store %arg6[%c0_37, %c2], %134 {strides = array<i32>} : memref<8x128xf32, #tpu.memory_space<vmem>>, vector<8x1xf32>,
    %136 = arith.mulf %119, %127 : vector<8x1xf32>
    %c0_38 = arith.constant 0 : index
    %c3 = arith.constant 3 : index
    %137 = vector.load %arg6[%c0_38, %c3] : memref<8x128xf32, #tpu.memory_space<vmem>>, vector<8x1xf32>
    tpu.vector_store %arg6[%c0_38, %c3], %136 {strides = array<i32>} : memref<8x128xf32, #tpu.memory_space<vmem>>, vector<8x1xf32>,
    %138 = arith.mulf %121, %127 : vector<8x1xf32>
    %c0_39 = arith.constant 0 : index
    %c4 = arith.constant 4 : index
    %139 = vector.load %arg6[%c0_39, %c4] : memref<8x128xf32, #tpu.memory_space<vmem>>, vector<8x1xf32>
    tpu.vector_store %arg6[%c0_39, %c4], %138 {strides = array<i32>} : memref<8x128xf32, #tpu.memory_space<vmem>>, vector<8x1xf32>,
    return
  }
  func.func @transform_0(%arg0: i32) -> (i32, i32) {
    %c0_i32 = arith.constant 0 : i32
    %c0_i32_0 = arith.constant 0 : i32
    return %arg0, %c0_i32 : i32, i32
  }
  func.func @transform_1(%arg0: i32) -> (i32, i32) {
    %c0_i32 = arith.constant 0 : i32
    %c0_i32_0 = arith.constant 0 : i32
    return %arg0, %c0_i32 : i32, i32
  }
  func.func @transform_2(%arg0: i32) -> (i32, i32) {
    %c0_i32 = arith.constant 0 : i32
    %c0_i32_0 = arith.constant 0 : i32
    %c0_i32_1 = arith.constant 0 : i32
    return %c0_i32, %c0_i32_0 : i32, i32
  }
  func.func @transform_3(%arg0: i32) -> (i32, i32) {
    %c0_i32 = arith.constant 0 : i32
    %c0_i32_0 = arith.constant 0 : i32
    %c0_i32_1 = arith.constant 0 : i32
    return %c0_i32, %c0_i32_0 : i32, i32
  }
  func.func @transform_4(%arg0: i32) -> (i32, i32) {
    %c0_i32 = arith.constant 0 : i32
    %c0_i32_0 = arith.constant 0 : i32
    %c0_i32_1 = arith.constant 0 : i32
    return %c0_i32, %c0_i32_0 : i32, i32
  }
  func.func @transform_5(%arg0: i32) -> (i32, i32) {
    %c0_i32 = arith.constant 0 : i32
    %c0_i32_0 = arith.constant 0 : i32
    return %arg0, %c0_i32 : i32, i32
  }
}

</mosaic_0001>

<llo_original>
// kernel: zerodnn_forward.1
$region0: #{zerodnn_forward.1}
  #allocation0 [shape = 'u32[]', space=smem, size = 0x4, offset = 0x4, fixed_abs, tag = 'smem constant byte address 0x4 - core index']
  #allocation1 [shape = 'u32[144,128]{1,0:T(1,128)}', space=vmem, size = 0x12000, scoped, tag = 'internal scratch']
  %s0 = inlined_call_operand.vmem [shape: s32[64,1], index: 0, kind: input, shape index: {}]
  %s1 = inlined_call_operand.vmem [shape: s32[40,1], index: 1, kind: input, shape index: {}]
  %s2 = inlined_call_operand.hbm [shape: bf16[128,384], index: 2, kind: input, shape index: {}]
  %s3 = inlined_call_operand.hbm [shape: bf16[384,256], index: 3, kind: input, shape index: {}]
  %s4 = inlined_call_operand.vmem [shape: f32[1,128], index: 4, kind: input, shape index: {}]
  %s5 = inlined_call_operand.vmem [shape: f32[8,128], index: 5, kind: output, shape index: {}]
  %s6 = sld [smem:[#allocation0]]
  $region38: #{zerodnn_forward.1} parent=0
    _
  %s8 = ssub.s32 1, %s6
  %s9 = scalar_select 0, %s8, %s6
  $region1: #{zerodnn_forward.1} parent=0
    #allocation2 [shape = 'u8[98304]{0}', space=vmem, size = 0x18000, scoped, tag = 'input window, operand 2, single buffered']
    #allocation3 [shape = 's32[1]{0}', space=sflag, size = 0x4, scoped, tag = 'scoped memory for zerodnn_forward.1']
    #allocation4 [shape = 'u8[196608]{0}', space=vmem, size = 0x30000, scoped, tag = 'input window, operand 3, single buffered']
    #allocation5 [shape = 's32[1]{0}', space=sflag, size = 0x4, scoped, tag = 'scoped memory for zerodnn_forward.1']
    %10 = vsyncpa [#allocation3], 0
    %11 = vsyncpa [#allocation5], 0
    // Predicated region
    $region2: #{zerodnn_forward.1} parent=1 // pred_check
      _
    $region3: #{zerodnn_forward.1} parent=1 // pred_check_branch
      %13 = sbr.rel (0) target = $region5
    $region4: #{zerodnn_forward.1} parent=1 // pred_region
      _
    $region5: #{zerodnn_forward.1} parent=1 // pred_fallthru
      _
    // Predicated region
    $region6: #{zerodnn_forward.1} parent=1 // pred_check
      _
    $region7: #{zerodnn_forward.1} parent=1 // pred_check_branch
      %15 = sbr.rel (0) target = $region9
    $region8: #{zerodnn_forward.1} parent=1 // pred_region
      _
    $region9: #{zerodnn_forward.1} parent=1 // pred_fallthru
      _
    // Predicated region
    $region10: #{zerodnn_forward.1} parent=1 // pred_check
      _
    $region11: #{zerodnn_forward.1} parent=1 // pred_check_branch
      %17 = sbr.rel (0) target = $region13
    $region12: #{zerodnn_forward.1} parent=1 // pred_region
      %s19 = ssub.s32 3072, 3072
      %20 = vsyncadd [#allocation3], %s19
      %s21 = sshll.u32 [#allocation2], 4
      %s22 = int_to_ptr.vmem [resolvable:$true] %s21
      %27 = dma.hbm_to_vmem [thread:$0]  %s2, 3072, %s22, [#allocation3], 192, 192, 12
    $region13: #{zerodnn_forward.1} parent=1 // pred_fallthru
      _
    // Predicated region
    $region14: #{zerodnn_forward.1} parent=1 // pred_check
      _
    $region15: #{zerodnn_forward.1} parent=1 // pred_check_branch
      %29 = sbr.rel (0) target = $region17
    $region16: #{zerodnn_forward.1} parent=1 // pred_region
      %s31 = ssub.s32 6144, 6144
      %32 = vsyncadd [#allocation5], %s31
      %s33 = sshll.u32 [#allocation4], 4
      %s34 = int_to_ptr.vmem [resolvable:$true] %s33
      %39 = dma.hbm_to_vmem [thread:$0]  %s3, 6144, %s34, [#allocation5], 128, 128, 8
    $region17: #{zerodnn_forward.1} parent=1 // pred_fallthru
      _
    // Predicated region
    $region18: #{zerodnn_forward.1} parent=1 // pred_check
      _
    $region19: #{zerodnn_forward.1} parent=1 // pred_check_branch
      %41 = sbr.rel (0) target = $region21
    $region20: #{zerodnn_forward.1} parent=1 // pred_region
      _
    $region21: #{zerodnn_forward.1} parent=1 // pred_fallthru
      _
    // Predicated region
    $region22: #{zerodnn_forward.1} parent=1 // pred_check
      _
    $region23: #{zerodnn_forward.1} parent=1 // pred_check_branch
      %43 = sbr.rel (0) target = $region25
    $region24: #{zerodnn_forward.1} parent=1 // pred_region
      %44 = dma.done [#allocation3], 3072
    $region25: #{zerodnn_forward.1} parent=1 // pred_fallthru
      _
    // Predicated region
    $region26: #{zerodnn_forward.1} parent=1 // pred_check
      _
    $region27: #{zerodnn_forward.1} parent=1 // pred_check_branch
      %46 = sbr.rel (0) target = $region29
    $region28: #{zerodnn_forward.1} parent=1 // pred_region
      %47 = dma.done [#allocation5], 6144
    $region29: #{zerodnn_forward.1} parent=1 // pred_fallthru
      _
    %v49 = vld [vmem:[%s0] sm:$0xff]
    %v50 = vld [vmem:[%s0 + $0x8] sm:$0xff]
    %v51 = vld [vmem:[%s0 + $0x10] sm:$0xff]
    %v52 = vld [vmem:[%s0 + $0x18] sm:$0xff]
    %v53 = vld [vmem:[%s0 + $0x20] sm:$0xff]
    %v54 = vld [vmem:[%s0 + $0x28] sm:$0xff]
    %v55 = vld [vmem:[%s0 + $0x30] sm:$0xff]
    %v56 = vld [vmem:[%s0 + $0x38] sm:$0xff]
    %v57 = vlaneseq
    %v58 = vand.u32 %v57, 127
    %59 = vset.pattern.permute.xlu0 0
    %60 = vperm.xlu0 %59, %v49
    %v61 = vpop.permute.xlu0 %60
    %62 = vset.pattern.permute.xlu0 0
    %63 = vperm.xlu0 %62, %v50
    %v64 = vpop.permute.xlu0 %63
    %65 = vset.pattern.permute.xlu0 0
    %66 = vperm.xlu0 %65, %v51
    %v67 = vpop.permute.xlu0 %66
    %68 = vset.pattern.permute.xlu0 0
    %69 = vperm.xlu0 %68, %v52
    %v70 = vpop.permute.xlu0 %69
    %71 = vset.pattern.permute.xlu0 0
    %72 = vperm.xlu0 %71, %v53
    %v73 = vpop.permute.xlu0 %72
    %74 = vset.pattern.permute.xlu0 0
    %75 = vperm.xlu0 %74, %v54
    %v76 = vpop.permute.xlu0 %75
    %77 = vset.pattern.permute.xlu0 0
    %78 = vperm.xlu0 %77, %v55
    %v79 = vpop.permute.xlu0 %78
    %80 = vset.pattern.permute.xlu0 0
    %81 = vperm.xlu0 %80, %v56
    %v82 = vpop.permute.xlu0 %81
    %vm83 = vcmp.eq.s32.totalorder %v61, %v58
    %vm84 = vcmp.eq.s32.totalorder %v64, %v58
    %vm85 = vcmp.eq.s32.totalorder %v67, %v58
    %vm86 = vcmp.eq.s32.totalorder %v70, %v58
    %vm87 = vcmp.eq.s32.totalorder %v73, %v58
    %vm88 = vcmp.eq.s32.totalorder %v76, %v58
    %vm89 = vcmp.eq.s32.totalorder %v79, %v58
    %vm90 = vcmp.eq.s32.totalorder %v82, %v58
    %v91 = vsel %vm83, 1, 0
    %v92 = vsel %vm84, 1, 0
    %v93 = vsel %vm85, 1, 0
    %v94 = vsel %vm86, 1, 0
    %v95 = vsel %vm87, 1, 0
    %v96 = vsel %vm88, 1, 0
    %v97 = vsel %vm89, 1, 0
    %v98 = vsel %vm90, 1, 0
    %v99 = vcvt.s32.f32 %v91
    %v100 = vcvt.s32.f32 %v92
    %v101 = vcvt.s32.f32 %v93
    %v102 = vcvt.s32.f32 %v94
    %v103 = vcvt.s32.f32 %v95
    %v104 = vcvt.s32.f32 %v96
    %v105 = vcvt.s32.f32 %v97
    %v106 = vcvt.s32.f32 %v98
    %v107 = vld [vmem:[%s1] sm:$0xff]
    %v108 = vld [vmem:[%s1 + $0x8] sm:$0xff]
    %v109 = vld [vmem:[%s1 + $0x10] sm:$0xff]
    %v110 = vld [vmem:[%s1 + $0x18] sm:$0xff]
    %v111 = vld [vmem:[%s1 + $0x20] sm:$0xff]
    %112 = vset.pattern.permute.xlu0 0
    %113 = vperm.xlu0 %112, %v107
    %v114 = vpop.permute.xlu0 %113
    %115 = vset.pattern.permute.xlu0 0
    %116 = vperm.xlu0 %115, %v108
    %v117 = vpop.permute.xlu0 %116
    %118 = vset.pattern.permute.xlu0 0
    %119 = vperm.xlu0 %118, %v109
    %v120 = vpop.permute.xlu0 %119
    %121 = vset.pattern.permute.xlu0 0
    %122 = vperm.xlu0 %121, %v110
    %v123 = vpop.permute.xlu0 %122
    %124 = vset.pattern.permute.xlu0 0
    %125 = vperm.xlu0 %124, %v111
    %v126 = vpop.permute.xlu0 %125
    %vm127 = vcmp.eq.s32.totalorder %v114, %v58
    %vm128 = vcmp.eq.s32.totalorder %v117, %v58
    %vm129 = vcmp.eq.s32.totalorder %v120, %v58
    %vm130 = vcmp.eq.s32.totalorder %v123, %v58
    %vm131 = vcmp.eq.s32.totalorder %v126, %v58
    %v132 = vsel %vm127, 1, 0
    %v133 = vsel %vm128, 1, 0
    %v134 = vsel %vm129, 1, 0
    %v135 = vsel %vm130, 1, 0
    %v136 = vsel %vm131, 1, 0
    %v137 = vcvt.s32.f32 %v132
    %v138 = vcvt.s32.f32 %v133
    %v139 = vcvt.s32.f32 %v134
    %v140 = vcvt.s32.f32 %v135
    %v141 = vcvt.s32.f32 %v136
    %v142 = vlaneseq
    %v143 = vshrl.u32 %v142, 7
    %v144 = vmul.u32 %v143, 8
    %vm145 = vcmp.ge.s32.totalorder %v58, %v144
    %v146 = vadd.s32 %v144, 8
    %vm147 = vcmp.lt.s32.totalorder %v58, %v146
    %vm148 = vmand %vm145, %vm147
    %v149 = vsel %vm148, 1, 0
    %v150 = vcvt.s32.f32 %v149
    %v151 = vmul.f32 %v150, 0.125
    %vm152 = vcmask 523264
    %v154 = vsel %vm152, %v151, 0
    %156 = vmatprep.subr.mxu0 0.0
    %157 = vmatpush1.msra.mxu0 %v99
    %158 = vmatprep.subr.mxu0 0.0
    %159 = vmatpush1.msra.mxu0 %v100
    %160 = vmatprep.subr.mxu0 0.0
    %161 = vmatpush1.msra.mxu0 %v101
    %162 = vmatprep.subr.mxu0 0.0
    %163 = vmatpush1.msra.mxu0 %v102
    %164 = vmatprep.subr.mxu0 0.0
    %165 = vmatpush1.msra.mxu0 %v103
    %166 = vmatprep.subr.mxu0 0.0
    %167 = vmatpush1.msra.mxu0 %v104
    %168 = vmatprep.subr.mxu0 0.0
    %169 = vmatpush1.msra.mxu0 %v105
    %170 = vmatprep.subr.mxu0 0.0
    %171 = vmatpush1.msra.mxu0 %v106
    %172 = vmatprep.subr.mxu0 0.0
    %173 = vmatpush1.msra.mxu0 0.0
    %174 = vmatprep.subr.mxu0 0.0
    %175 = vmatpush1.msra.mxu0 0.0
    %176 = vmatprep.subr.mxu0 0.0
    %177 = vmatpush1.msra.mxu0 0.0
    %178 = vmatprep.subr.mxu0 0.0
    %179 = vmatpush1.msra.mxu0 0.0
    %180 = vmatprep.subr.mxu0 0.0
    %181 = vmatpush1.msra.mxu0 0.0
    %182 = vmatprep.subr.mxu0 0.0
    %183 = vmatpush1.msra.mxu0 0.0
    %184 = vmatprep.subr.mxu0 0.0
    %185 = vmatpush1.msra.mxu0 0.0
    %186 = vmatprep.subr.mxu0 0.0
    %187 = vmatpush1.msra.mxu0 0.0
    %188 = vmatprep.subr.mxu0 0.0
    %189 = vmatpush1.msra.mxu0 0.0
    %190 = vmatprep.subr.mxu0 0.0
    %191 = vmatpush1.msra.mxu0 0.0
    %192 = vmatprep.subr.mxu0 0.0
    %193 = vmatpush1.msra.mxu0 0.0
    %194 = vmatprep.subr.mxu0 0.0
    %195 = vmatpush1.msra.mxu0 0.0
    %196 = vmatprep.subr.mxu0 0.0
    %197 = vmatpush1.msra.mxu0 0.0
    %198 = vmatprep.subr.mxu0 0.0
    %199 = vmatpush1.msra.mxu0 0.0
    %200 = vmatprep.subr.mxu0 0.0
    %201 = vmatpush1.msra.mxu0 0.0
    %202 = vmatprep.subr.mxu0 0.0
    %203 = vmatpush1.msra.mxu0 0.0
    %204 = vmatprep.subr.mxu0 0.0
    %205 = vmatpush1.msra.mxu0 0.0
    %206 = vmatprep.subr.mxu0 0.0
    %207 = vmatpush1.msra.mxu0 0.0
    %208 = vmatprep.subr.mxu0 0.0
    %209 = vmatpush1.msra.mxu0 0.0
    %210 = vmatprep.subr.mxu0 0.0
    %211 = vmatpush1.msra.mxu0 0.0
    %212 = vmatprep.subr.mxu0 0.0
    %213 = vmatpush1.msra.mxu0 0.0
    %214 = vmatprep.subr.mxu0 0.0
    %215 = vmatpush1.msra.mxu0 0.0
    %216 = vmatprep.subr.mxu0 0.0
    %217 = vmatpush1.msra.mxu0 0.0
    %218 = vmatprep.subr.mxu0 0.0
    %219 = vmatpush1.msra.mxu0 0.0
    %220 = vmatprep.mubr.f32.mxu0 0.0
    %221 = vmatmul.mubr.f32.gmra.mrb[0].mxu0 %v154
    %v222 = vpop.f32.mrb[0].mxu0
    %v223 = vadd.f32 0.0, %v222
    %v224 = vpop.f32.mrb[0].mxu0
    %225 = vdwg.mxu0
    %v226 = vpack.c.bf16 %v137, %v223
    %v227 = vpack.c.bf16 %v139, %v138
    %v228 = vpack.c.bf16 %v141, %v140
    %v229 = vld [vmem:[#allocation2] sm:$0xff]
    %v230 = vld [vmem:[#allocation2 + $0x8] sm:$0xf]
    %v231 = vld [vmem:[#allocation2 + $0xc] sm:$0xff]
    %v232 = vld [vmem:[#allocation2 + $0x14] sm:$0xf]
    %v233 = vld [vmem:[#allocation2 + $0x18] sm:$0xff]
    %v234 = vld [vmem:[#allocation2 + $0x20] sm:$0xf]
    %v235 = vld [vmem:[#allocation2 + $0x24] sm:$0xff]
    %v236 = vld [vmem:[#allocation2 + $0x2c] sm:$0xf]
    %v237 = vld [vmem:[#allocation2 + $0x30] sm:$0xff]
    %v238 = vld [vmem:[#allocation2 + $0x38] sm:$0xf]
    %v239 = vld [vmem:[#allocation2 + $0x3c] sm:$0xff]
    %v240 = vld [vmem:[#allocation2 + $0x44] sm:$0xf]
    %v241 = vld [vmem:[#allocation2 + $0x48] sm:$0xff]
    %v242 = vld [vmem:[#allocation2 + $0x50] sm:$0xf]
    %v243 = vld [vmem:[#allocation2 + $0x54] sm:$0xff]
    %v244 = vld [vmem:[#allocation2 + $0x5c] sm:$0xf]
    %v245 = vld [vmem:[#allocation2 + $0x60] sm:$0xff]
    %v246 = vld [vmem:[#allocation2 + $0x68] sm:$0xf]
    %v247 = vld [vmem:[#allocation2 + $0x6c] sm:$0xff]
    %v248 = vld [vmem:[#allocation2 + $0x74] sm:$0xf]
    %v249 = vld [vmem:[#allocation2 + $0x78] sm:$0xff]
    %v250 = vld [vmem:[#allocation2 + $0x80] sm:$0xf]
    %v251 = vld [vmem:[#allocation2 + $0x84] sm:$0xff]
    %v252 = vld [vmem:[#allocation2 + $0x8c] sm:$0xf]
    %v253 = vld [vmem:[#allocation2 + $0x90] sm:$0xff]
    %v254 = vld [vmem:[#allocation2 + $0x98] sm:$0xf]
    %v255 = vld [vmem:[#allocation2 + $0x9c] sm:$0xff]
    %v256 = vld [vmem:[#allocation2 + $0xa4] sm:$0xf]
    %v257 = vld [vmem:[#allocation2 + $0xa8] sm:$0xff]
    %v258 = vld [vmem:[#allocation2 + $0xb0] sm:$0xf]
    %v259 = vld [vmem:[#allocation2 + $0xb4] sm:$0xff]
    %v260 = vld [vmem:[#allocation2 + $0xbc] sm:$0xf]
    %v293 = vunpack.c.l.b16 %v229
    %v294 = vunpack.c.h.b16 %v229
    %v295 = vunpack.c.l.b16 %v230
    %v296 = vunpack.c.l.b16 %v231
    %v297 = vunpack.c.h.b16 %v231
    %v298 = vunpack.c.l.b16 %v232
    %v299 = vunpack.c.l.b16 %v233
    %v300 = vunpack.c.h.b16 %v233
    %v301 = vunpack.c.l.b16 %v234
    %v302 = vunpack.c.l.b16 %v235
    %v303 = vunpack.c.h.b16 %v235
    %v304 = vunpack.c.l.b16 %v236
    %v305 = vunpack.c.l.b16 %v237
    %v306 = vunpack.c.h.b16 %v237
    %v307 = vunpack.c.l.b16 %v238
    %v308 = vunpack.c.l.b16 %v239
    %v309 = vunpack.c.h.b16 %v239
    %v310 = vunpack.c.l.b16 %v240
    %v311 = vunpack.c.l.b16 %v241
    %v312 = vunpack.c.h.b16 %v241
    %v313 = vunpack.c.l.b16 %v242
    %v314 = vunpack.c.l.b16 %v243
    %v315 = vunpack.c.h.b16 %v243
    %v316 = vunpack.c.l.b16 %v244
    %v317 = vunpack.c.l.b16 %v245
    %v318 = vunpack.c.h.b16 %v245
    %v319 = vunpack.c.l.b16 %v246
    %v320 = vunpack.c.l.b16 %v247
    %v321 = vunpack.c.h.b16 %v247
    %v322 = vunpack.c.l.b16 %v248
    %v323 = vunpack.c.l.b16 %v249
    %v324 = vunpack.c.h.b16 %v249
    %v325 = vunpack.c.l.b16 %v250
    %v326 = vunpack.c.l.b16 %v251
    %v327 = vunpack.c.h.b16 %v251
    %v328 = vunpack.c.l.b16 %v252
    %v329 = vunpack.c.l.b16 %v253
    %v330 = vunpack.c.h.b16 %v253
    %v331 = vunpack.c.l.b16 %v254
    %v332 = vunpack.c.l.b16 %v255
    %v333 = vunpack.c.h.b16 %v255
    %v334 = vunpack.c.l.b16 %v256
    %v335 = vunpack.c.l.b16 %v257
    %v336 = vunpack.c.h.b16 %v257
    %v337 = vunpack.c.l.b16 %v258
    %v338 = vunpack.c.l.b16 %v259
    %v339 = vunpack.c.h.b16 %v259
    %v340 = vunpack.c.l.b16 %v260
    %v341 = vpack.c.b16 %v296, %v293
    %v342 = vpack.c.b16 %v297, %v294
    %v343 = vpack.c.b16 %v298, %v295
    %v344 = vpack.c.b16 %v302, %v299
    %v345 = vpack.c.b16 %v303, %v300
    %v346 = vpack.c.b16 %v304, %v301
    %v347 = vpack.c.b16 %v308, %v305
    %v348 = vpack.c.b16 %v309, %v306
    %v349 = vpack.c.b16 %v310, %v307
    %v350 = vpack.c.b16 %v314, %v311
    %v351 = vpack.c.b16 %v315, %v312
    %v352 = vpack.c.b16 %v316, %v313
    %v353 = vpack.c.b16 %v320, %v317
    %v354 = vpack.c.b16 %v321, %v318
    %v355 = vpack.c.b16 %v322, %v319
    %v356 = vpack.c.b16 %v326, %v323
    %v357 = vpack.c.b16 %v327, %v324
    %v358 = vpack.c.b16 %v328, %v325
    %v359 = vpack.c.b16 %v332, %v329
    %v360 = vpack.c.b16 %v333, %v330
    %v361 = vpack.c.b16 %v334, %v331
    %v362 = vpack.c.b16 %v338, %v335
    %v363 = vpack.c.b16 %v339, %v336
    %v364 = vpack.c.b16 %v340, %v337
    %389 = vmatprep.subr.bf16.mxu0 %v342
    %390 = vmatpush1.bf16.msra.mxu0 %v341
    %391 = vmatprep.subr.bf16.mxu0 %v345
    %392 = vmatpush1.bf16.msra.mxu0 %v344
    %393 = vmatprep.subr.bf16.mxu0 %v348
    %394 = vmatpush1.bf16.msra.mxu0 %v347
    %395 = vmatprep.subr.bf16.mxu0 %v351
    %396 = vmatpush1.bf16.msra.mxu0 %v350
    %397 = vmatprep.subr.bf16.mxu0 %v354
    %398 = vmatpush1.bf16.msra.mxu0 %v353
    %399 = vmatprep.subr.bf16.mxu0 %v357
    %400 = vmatpush1.bf16.msra.mxu0 %v356
    %401 = vmatprep.subr.bf16.mxu0 %v360
    %402 = vmatpush1.bf16.msra.mxu0 %v359
    %403 = vmatprep.subr.bf16.mxu0 %v363
    %404 = vmatpush1.bf16.msra.mxu0 %v362
    %405 = vmatprep.subr.bf16.mxu0 0
    %406 = vmatpush1.bf16.msra.mxu0 0
    %407 = vmatprep.subr.bf16.mxu0 0
    %408 = vmatpush1.bf16.msra.mxu0 0
    %409 = vmatprep.subr.bf16.mxu0 0
    %410 = vmatpush1.bf16.msra.mxu0 0
    %411 = vmatprep.subr.bf16.mxu0 0
    %412 = vmatpush1.bf16.msra.mxu0 0
    %413 = vmatprep.subr.bf16.mxu0 0
    %414 = vmatpush1.bf16.msra.mxu0 0
    %415 = vmatprep.subr.bf16.mxu0 0
    %416 = vmatpush1.bf16.msra.mxu0 0
    %417 = vmatprep.subr.bf16.mxu0 0
    %418 = vmatpush1.bf16.msra.mxu0 0
    %419 = vmatprep.subr.bf16.mxu0 0
    %420 = vmatpush1.bf16.msra.mxu0 0
    %421 = vmatprep.mubr.bf16.mxu0 0
    %422 = vmatmul.mubr.bf16.gmra.mrb[0].mxu0 %v226
    %v423 = vpop.f32.mrb[0].mxu0
    %v424 = vadd.f32 0.0, %v423
    %v425 = vpop.f32.mrb[0].mxu0
    %v426 = vadd.f32 0.0, %v425
    %v427 = vpop.f32.mrb[0].mxu0
    %v428 = vadd.f32 0.0, %v427
    %v429 = vpop.f32.mrb[0].mxu0
    %v430 = vadd.f32 0.0, %v429
    %431 = vmatprep.mubr.bf16.mxu0 0
    %432 = vmatmul.mubr.bf16.gmra.mrb[0].mxu0 %v227
    %v433 = vpop.f32.mrb[0].mxu0
    %v434 = vadd.f32 0.0, %v433
    %v435 = vpop.f32.mrb[0].mxu0
    %v436 = vadd.f32 0.0, %v435
    %v437 = vpop.f32.mrb[0].mxu0
    %v438 = vadd.f32 0.0, %v437
    %v439 = vpop.f32.mrb[0].mxu0
    %v440 = vadd.f32 0.0, %v439
    %441 = vmatprep.mubr.bf16.mxu0 0
    %442 = vmatmul.mubr.bf16.gmra.mrb[0].mxu0 %v228
    %v443 = vpop.f32.mrb[0].mxu0
    %v444 = vadd.f32 0.0, %v443
    %v445 = vpop.f32.mrb[0].mxu0
    %v446 = vadd.f32 0.0, %v445
    %v447 = vpop.f32.mrb[0].mxu0
    %v448 = vadd.f32 0.0, %v447
    %v449 = vpop.f32.mrb[0].mxu0
    %v450 = vadd.f32 0.0, %v449
    %451 = vdwg.mxu0
    %452 = vmatprep.subr.bf16.mxu0 0
    %453 = vmatpush1.bf16.msra.mxu0 %v343
    %454 = vmatprep.subr.bf16.mxu0 0
    %455 = vmatpush1.bf16.msra.mxu0 %v346
    %456 = vmatprep.subr.bf16.mxu0 0
    %457 = vmatpush1.bf16.msra.mxu0 %v349
    %458 = vmatprep.subr.bf16.mxu0 0
    %459 = vmatpush1.bf16.msra.mxu0 %v352
    %460 = vmatprep.subr.bf16.mxu0 0
    %461 = vmatpush1.bf16.msra.mxu0 %v355
    %462 = vmatprep.subr.bf16.mxu0 0
    %463 = vmatpush1.bf16.msra.mxu0 %v358
    %464 = vmatprep.subr.bf16.mxu0 0
    %465 = vmatpush1.bf16.msra.mxu0 %v361
    %466 = vmatprep.subr.bf16.mxu0 0
    %467 = vmatpush1.bf16.msra.mxu0 %v364
    %468 = vmatprep.subr.bf16.mxu0 0
    %469 = vmatpush1.bf16.msra.mxu0 0
    %470 = vmatprep.subr.bf16.mxu0 0
    %471 = vmatpush1.bf16.msra.mxu0 0
    %472 = vmatprep.subr.bf16.mxu0 0
    %473 = vmatpush1.bf16.msra.mxu0 0
    %474 = vmatprep.subr.bf16.mxu0 0
    %475 = vmatpush1.bf16.msra.mxu0 0
    %476 = vmatprep.subr.bf16.mxu0 0
    %477 = vmatpush1.bf16.msra.mxu0 0
    %478 = vmatprep.subr.bf16.mxu0 0
    %479 = vmatpush1.bf16.msra.mxu0 0
    %480 = vmatprep.subr.bf16.mxu0 0
    %481 = vmatpush1.bf16.msra.mxu0 0
    %482 = vmatprep.subr.bf16.mxu0 0
    %483 = vmatpush1.bf16.msra.mxu0 0
    %484 = vmatprep.mubr.bf16.mxu0 0
    %485 = vmatmul.mubr.bf16.gmra.mrb[0].mxu0 %v226
    %v486 = vpop.f32.mrb[0].mxu0
    %v487 = vadd.f32 0.0, %v486
    %v488 = vpop.f32.mrb[0].mxu0
    %v489 = vpop.f32.mrb[0].mxu0
    %v490 = vadd.f32 0.0, %v489
    %v491 = vpop.f32.mrb[0].mxu0
    %492 = vmatprep.mubr.bf16.mxu0 0
    %493 = vmatmul.mubr.bf16.gmra.mrb[0].mxu0 %v227
    %v494 = vpop.f32.mrb[0].mxu0
    %v495 = vadd.f32 0.0, %v494
    %v496 = vpop.f32.mrb[0].mxu0
    %v497 = vpop.f32.mrb[0].mxu0
    %v498 = vadd.f32 0.0, %v497
    %v499 = vpop.f32.mrb[0].mxu0
    %500 = vmatprep.mubr.bf16.mxu0 0
    %501 = vmatmul.mubr.bf16.gmra.mrb[0].mxu0 %v228
    %v502 = vpop.f32.mrb[0].mxu0
    %v503 = vadd.f32 0.0, %v502
    %v504 = vpop.f32.mrb[0].mxu0
    %v505 = vpop.f32.mrb[0].mxu0
    %v506 = vadd.f32 0.0, %v505
    %v507 = vpop.f32.mrb[0].mxu0
    %508 = vdwg.mxu0
    %v509 = vpack.c.bf16 %v428, %v424
    %v510 = vpack.c.bf16 %v430, %v426
    %v511 = vpack.c.bf16 %v490, %v487
    %v512 = vpack.c.bf16 %v438, %v434
    %v513 = vpack.c.bf16 %v440, %v436
    %v514 = vpack.c.bf16 %v498, %v495
    %v515 = vpack.c.bf16 %v448, %v444
    %v516 = vpack.c.bf16 %v450, %v446
    %v517 = vpack.c.bf16 %v506, %v503
    %v518 = vld [vmem:[#allocation4] sm:$0xff]
    %v519 = vld [vmem:[#allocation4 + $0x8] sm:$0xff]
    %v520 = vld [vmem:[#allocation4 + $0x10] sm:$0xff]
    %v521 = vld [vmem:[#allocation4 + $0x18] sm:$0xff]
    %v522 = vld [vmem:[#allocation4 + $0x20] sm:$0xff]
    %v523 = vld [vmem:[#allocation4 + $0x28] sm:$0xff]
    %v524 = vld [vmem:[#allocation4 + $0x30] sm:$0xff]
    %v525 = vld [vmem:[#allocation4 + $0x38] sm:$0xff]
    %v526 = vld [vmem:[#allocation4 + $0x40] sm:$0xff]
    %v527 = vld [vmem:[#allocation4 + $0x48] sm:$0xff]
    %v528 = vld [vmem:[#allocation4 + $0x50] sm:$0xff]
    %v529 = vld [vmem:[#allocation4 + $0x58] sm:$0xff]
    %v530 = vld [vmem:[#allocation4 + $0x60] sm:$0xff]
    %v531 = vld [vmem:[#allocation4 + $0x68] sm:$0xff]
    %v532 = vld [vmem:[#allocation4 + $0x70] sm:$0xff]
    %v533 = vld [vmem:[#allocation4 + $0x78] sm:$0xff]
    %v534 = vld [vmem:[#allocation4 + $0x80] sm:$0xff]
    %v535 = vld [vmem:[#allocation4 + $0x88] sm:$0xff]
    %v536 = vld [vmem:[#allocation4 + $0x90] sm:$0xff]
    %v537 = vld [vmem:[#allocation4 + $0x98] sm:$0xff]
    %v538 = vld [vmem:[#allocation4 + $0xa0] sm:$0xff]
    %v539 = vld [vmem:[#allocation4 + $0xa8] sm:$0xff]
    %v540 = vld [vmem:[#allocation4 + $0xb0] sm:$0xff]
    %v541 = vld [vmem:[#allocation4 + $0xb8] sm:$0xff]
    %v542 = vld [vmem:[#allocation4 + $0xc0] sm:$0xff]
    %v543 = vld [vmem:[#allocation4 + $0xc8] sm:$0xff]
    %v544 = vld [vmem:[#allocation4 + $0xd0] sm:$0xff]
    %v545 = vld [vmem:[#allocation4 + $0xd8] sm:$0xff]
    %v546 = vld [vmem:[#allocation4 + $0xe0] sm:$0xff]
    %v547 = vld [vmem:[#allocation4 + $0xe8] sm:$0xff]
    %v548 = vld [vmem:[#allocation4 + $0xf0] sm:$0xff]
    %v549 = vld [vmem:[#allocation4 + $0xf8] sm:$0xff]
    %v550 = vld [vmem:[#allocation4 + $0x100] sm:$0xff]
    %v551 = vld [vmem:[#allocation4 + $0x108] sm:$0xff]
    %v552 = vld [vmem:[#allocation4 + $0x110] sm:$0xff]
    %v553 = vld [vmem:[#allocation4 + $0x118] sm:$0xff]
    %v554 = vld [vmem:[#allocation4 + $0x120] sm:$0xff]
    %v555 = vld [vmem:[#allocation4 + $0x128] sm:$0xff]
    %v556 = vld [vmem:[#allocation4 + $0x130] sm:$0xff]
    %v557 = vld [vmem:[#allocation4 + $0x138] sm:$0xff]
    %v558 = vld [vmem:[#allocation4 + $0x140] sm:$0xff]
    %v559 = vld [vmem:[#allocation4 + $0x148] sm:$0xff]
    %v560 = vld [vmem:[#allocation4 + $0x150] sm:$0xff]
    %v561 = vld [vmem:[#allocation4 + $0x158] sm:$0xff]
    %v562 = vld [vmem:[#allocation4 + $0x160] sm:$0xff]
    %v563 = vld [vmem:[#allocation4 + $0x168] sm:$0xff]
    %v564 = vld [vmem:[#allocation4 + $0x170] sm:$0xff]
    %v565 = vld [vmem:[#allocation4 + $0x178] sm:$0xff]
    %v614 = vunpack.c.l.b16 %v518
    %v615 = vunpack.c.h.b16 %v518
    %v616 = vunpack.c.l.b16 %v519
    %v617 = vunpack.c.h.b16 %v519
    %v618 = vunpack.c.l.b16 %v520
    %v619 = vunpack.c.h.b16 %v520
    %v620 = vunpack.c.l.b16 %v521
    %v621 = vunpack.c.h.b16 %v521
    %v622 = vunpack.c.l.b16 %v522
    %v623 = vunpack.c.h.b16 %v522
    %v624 = vunpack.c.l.b16 %v523
    %v625 = vunpack.c.h.b16 %v523
    %v626 = vunpack.c.l.b16 %v524
    %v627 = vunpack.c.h.b16 %v524
    %v628 = vunpack.c.l.b16 %v525
    %v629 = vunpack.c.h.b16 %v525
    %v630 = vunpack.c.l.b16 %v526
    %v631 = vunpack.c.h.b16 %v526
    %v632 = vunpack.c.l.b16 %v527
    %v633 = vunpack.c.h.b16 %v527
    %v634 = vunpack.c.l.b16 %v528
    %v635 = vunpack.c.h.b16 %v528
    %v636 = vunpack.c.l.b16 %v529
    %v637 = vunpack.c.h.b16 %v529
    %v638 = vunpack.c.l.b16 %v530
    %v639 = vunpack.c.h.b16 %v530
    %v640 = vunpack.c.l.b16 %v531
    %v641 = vunpack.c.h.b16 %v531
    %v642 = vunpack.c.l.b16 %v532
    %v643 = vunpack.c.h.b16 %v532
    %v644 = vunpack.c.l.b16 %v533
    %v645 = vunpack.c.h.b16 %v533
    %v646 = vunpack.c.l.b16 %v534
    %v647 = vunpack.c.h.b16 %v534
    %v648 = vunpack.c.l.b16 %v535
    %v649 = vunpack.c.h.b16 %v535
    %v650 = vunpack.c.l.b16 %v536
    %v651 = vunpack.c.h.b16 %v536
    %v652 = vunpack.c.l.b16 %v537
    %v653 = vunpack.c.h.b16 %v537
    %v654 = vunpack.c.l.b16 %v538
    %v655 = vunpack.c.h.b16 %v538
    %v656 = vunpack.c.l.b16 %v539
    %v657 = vunpack.c.h.b16 %v539
    %v658 = vunpack.c.l.b16 %v540
    %v659 = vunpack.c.h.b16 %v540
    %v660 = vunpack.c.l.b16 %v541
    %v661 = vunpack.c.h.b16 %v541
    %v662 = vunpack.c.l.b16 %v542
    %v663 = vunpack.c.h.b16 %v542
    %v664 = vunpack.c.l.b16 %v543
    %v665 = vunpack.c.h.b16 %v543
    %v666 = vunpack.c.l.b16 %v544
    %v667 = vunpack.c.h.b16 %v544
    %v668 = vunpack.c.l.b16 %v545
    %v669 = vunpack.c.h.b16 %v545
    %v670 = vunpack.c.l.b16 %v546
    %v671 = vunpack.c.h.b16 %v546
    %v672 = vunpack.c.l.b16 %v547
    %v673 = vunpack.c.h.b16 %v547
    %v674 = vunpack.c.l.b16 %v548
    %v675 = vunpack.c.h.b16 %v548
    %v676 = vunpack.c.l.b16 %v549
    %v677 = vunpack.c.h.b16 %v549
    %v678 = vunpack.c.l.b16 %v550
    %v679 = vunpack.c.h.b16 %v550
    %v680 = vunpack.c.l.b16 %v551
    %v681 = vunpack.c.h.b16 %v551
    %v682 = vunpack.c.l.b16 %v552
    %v683 = vunpack.c.h.b16 %v552
    %v684 = vunpack.c.l.b16 %v553
    %v685 = vunpack.c.h.b16 %v553
    %v686 = vunpack.c.l.b16 %v554
    %v687 = vunpack.c.h.b16 %v554
    %v688 = vunpack.c.l.b16 %v555
    %v689 = vunpack.c.h.b16 %v555
    %v690 = vunpack.c.l.b16 %v556
    %v691 = vunpack.c.h.b16 %v556
    %v692 = vunpack.c.l.b16 %v557
    %v693 = vunpack.c.h.b16 %v557
    %v694 = vunpack.c.l.b16 %v558
    %v695 = vunpack.c.h.b16 %v558
    %v696 = vunpack.c.l.b16 %v559
    %v697 = vunpack.c.h.b16 %v559
    %v698 = vunpack.c.l.b16 %v560
    %v699 = vunpack.c.h.b16 %v560
    %v700 = vunpack.c.l.b16 %v561
    %v701 = vunpack.c.h.b16 %v561
    %v702 = vunpack.c.l.b16 %v562
    %v703 = vunpack.c.h.b16 %v562
    %v704 = vunpack.c.l.b16 %v563
    %v705 = vunpack.c.h.b16 %v563
    %v706 = vunpack.c.l.b16 %v564
    %v707 = vunpack.c.h.b16 %v564
    %v708 = vunpack.c.l.b16 %v565
    %v709 = vunpack.c.h.b16 %v565
    %v710 = vpack.c.b16 %v616, %v614
    %v711 = vpack.c.b16 %v617, %v615
    %v712 = vpack.c.b16 %v620, %v618
    %v713 = vpack.c.b16 %v621, %v619
    %v714 = vpack.c.b16 %v624, %v622
    %v715 = vpack.c.b16 %v625, %v623
    %v716 = vpack.c.b16 %v628, %v626
    %v717 = vpack.c.b16 %v629, %v627
    %v718 = vpack.c.b16 %v632, %v630
    %v719 = vpack.c.b16 %v633, %v631
    %v720 = vpack.c.b16 %v636, %v634
    %v721 = vpack.c.b16 %v637, %v635
    %v722 = vpack.c.b16 %v640, %v638
    %v723 = vpack.c.b16 %v641, %v639
    %v724 = vpack.c.b16 %v644, %v642
    %v725 = vpack.c.b16 %v645, %v643
    %v726 = vpack.c.b16 %v648, %v646
    %v727 = vpack.c.b16 %v649, %v647
    %v728 = vpack.c.b16 %v652, %v650
    %v729 = vpack.c.b16 %v653, %v651
    %v730 = vpack.c.b16 %v656, %v654
    %v731 = vpack.c.b16 %v657, %v655
    %v732 = vpack.c.b16 %v660, %v658
    %v733 = vpack.c.b16 %v661, %v659
    %v734 = vpack.c.b16 %v664, %v662
    %v735 = vpack.c.b16 %v665, %v663
    %v736 = vpack.c.b16 %v668, %v666
    %v737 = vpack.c.b16 %v669, %v667
    %v738 = vpack.c.b16 %v672, %v670
    %v739 = vpack.c.b16 %v673, %v671
    %v740 = vpack.c.b16 %v676, %v674
    %v741 = vpack.c.b16 %v677, %v675
    %v742 = vpack.c.b16 %v680, %v678
    %v743 = vpack.c.b16 %v681, %v679
    %v744 = vpack.c.b16 %v684, %v682
    %v745 = vpack.c.b16 %v685, %v683
    %v746 = vpack.c.b16 %v688, %v686
    %v747 = vpack.c.b16 %v689, %v687
    %v748 = vpack.c.b16 %v692, %v690
    %v749 = vpack.c.b16 %v693, %v691
    %v750 = vpack.c.b16 %v696, %v694
    %v751 = vpack.c.b16 %v697, %v695
    %v752 = vpack.c.b16 %v700, %v698
    %v753 = vpack.c.b16 %v701, %v699
    %v754 = vpack.c.b16 %v704, %v702
    %v755 = vpack.c.b16 %v705, %v703
    %v756 = vpack.c.b16 %v708, %v706
    %v757 = vpack.c.b16 %v709, %v707
    %806 = vmatprep.subr.bf16.mxu0 %v711
    %807 = vmatpush1.bf16.msra.mxu0 %v710
    %808 = vmatprep.subr.bf16.mxu0 %v713
    %809 = vmatpush1.bf16.msra.mxu0 %v712
    %810 = vmatprep.subr.bf16.mxu0 %v715
    %811 = vmatpush1.bf16.msra.mxu0 %v714
    %812 = vmatprep.subr.bf16.mxu0 %v717
    %813 = vmatpush1.bf16.msra.mxu0 %v716
    %814 = vmatprep.subr.bf16.mxu0 %v719
    %815 = vmatpush1.bf16.msra.mxu0 %v718
    %816 = vmatprep.subr.bf16.mxu0 %v721
    %817 = vmatpush1.bf16.msra.mxu0 %v720
    %818 = vmatprep.subr.bf16.mxu0 %v723
    %819 = vmatpush1.bf16.msra.mxu0 %v722
    %820 = vmatprep.subr.bf16.mxu0 %v725
    %821 = vmatpush1.bf16.msra.mxu0 %v724
    %822 = vmatprep.subr.bf16.mxu0 %v727
    %823 = vmatpush1.bf16.msra.mxu0 %v726
    %824 = vmatprep.subr.bf16.mxu0 %v729
    %825 = vmatpush1.bf16.msra.mxu0 %v728
    %826 = vmatprep.subr.bf16.mxu0 %v731
    %827 = vmatpush1.bf16.msra.mxu0 %v730
    %828 = vmatprep.subr.bf16.mxu0 %v733
    %829 = vmatpush1.bf16.msra.mxu0 %v732
    %830 = vmatprep.subr.bf16.mxu0 %v735
    %831 = vmatpush1.bf16.msra.mxu0 %v734
    %832 = vmatprep.subr.bf16.mxu0 %v737
    %833 = vmatpush1.bf16.msra.mxu0 %v736
    %834 = vmatprep.subr.bf16.mxu0 %v739
    %835 = vmatpush1.bf16.msra.mxu0 %v738
    %836 = vmatprep.subr.bf16.mxu0 %v741
    %837 = vmatpush1.bf16.msra.mxu0 %v740
    %838 = vmatprep.mubr.bf16.mxu0 %v510
    %839 = vmatmul.mubr.bf16.gmra.mrb[0].mxu0 %v509
    %v840 = vpop.f32.mrb[0].mxu0
    %v841 = vadd.f32 0.0, %v840
    %v842 = vpop.f32.mrb[0].mxu0
    %v843 = vpop.f32.mrb[0].mxu0
    %v844 = vpop.f32.mrb[0].mxu0
    %v845 = vadd.f32 0.0, %v844
    %846 = vmatprep.mubr.bf16.mxu0 %v513
    %847 = vmatmul.mubr.bf16.gmra.mrb[0].mxu0 %v512
    %v848 = vpop.f32.mrb[0].mxu0
    %v849 = vpop.f32.mrb[0].mxu0
    %v850 = vadd.f32 0.0, %v849
    %v851 = vpop.f32.mrb[0].mxu0
    %v852 = vpop.f32.mrb[0].mxu0
    %v853 = vadd.f32 0.0, %v852
    %854 = vmatprep.mubr.bf16.mxu0 %v516
    %855 = vmatmul.mubr.bf16.gmra.mrb[0].mxu0 %v515
    %v856 = vpop.f32.mrb[0].mxu0
    %v857 = vpop.f32.mrb[0].mxu0
    %v858 = vadd.f32 0.0, %v857
    %v859 = vpop.f32.mrb[0].mxu0
    %v860 = vpop.f32.mrb[0].mxu0
    %v861 = vadd.f32 0.0, %v860
    %862 = vdwg.mxu0
    %863 = vmatprep.subr.bf16.mxu0 %v743
    %864 = vmatpush1.bf16.msra.mxu0 %v742
    %865 = vmatprep.subr.bf16.mxu0 %v745
    %866 = vmatpush1.bf16.msra.mxu0 %v744
    %867 = vmatprep.subr.bf16.mxu0 %v747
    %868 = vmatpush1.bf16.msra.mxu0 %v746
    %869 = vmatprep.subr.bf16.mxu0 %v749
    %870 = vmatpush1.bf16.msra.mxu0 %v748
    %871 = vmatprep.subr.bf16.mxu0 %v751
    %872 = vmatpush1.bf16.msra.mxu0 %v750
    %873 = vmatprep.subr.bf16.mxu0 %v753
    %874 = vmatpush1.bf16.msra.mxu0 %v752
    %875 = vmatprep.subr.bf16.mxu0 %v755
    %876 = vmatpush1.bf16.msra.mxu0 %v754
    %877 = vmatprep.subr.bf16.mxu0 %v757
    %878 = vmatpush1.bf16.msra.mxu0 %v756
    %879 = vmatprep.subr.bf16.mxu0 0
    %880 = vmatpush1.bf16.msra.mxu0 0
    %881 = vmatprep.subr.bf16.mxu0 0
    %882 = vmatpush1.bf16.msra.mxu0 0
    %883 = vmatprep.subr.bf16.mxu0 0
    %884 = vmatpush1.bf16.msra.mxu0 0
    %885 = vmatprep.subr.bf16.mxu0 0
    %886 = vmatpush1.bf16.msra.mxu0 0
    %887 = vmatprep.subr.bf16.mxu0 0
    %888 = vmatpush1.bf16.msra.mxu0 0
    %889 = vmatprep.subr.bf16.mxu0 0
    %890 = vmatpush1.bf16.msra.mxu0 0
    %891 = vmatprep.subr.bf16.mxu0 0
    %892 = vmatpush1.bf16.msra.mxu0 0
    %893 = vmatprep.subr.bf16.mxu0 0
    %894 = vmatpush1.bf16.msra.mxu0 0
    %895 = vmatprep.mubr.bf16.mxu0 0
    %896 = vmatmul.mubr.bf16.gmra.mrb[0].mxu0 %v511
    %v897 = vpop.f32.mrb[0].mxu0
    %v898 = vadd.f32 %v841, %v897
    %v899 = vpop.f32.mrb[0].mxu0
    %v900 = vpop.f32.mrb[0].mxu0
    %v901 = vpop.f32.mrb[0].mxu0
    %v902 = vadd.f32 %v845, %v901
    %903 = vmatprep.mubr.bf16.mxu0 0
    %904 = vmatmul.mubr.bf16.gmra.mrb[0].mxu0 %v514
    %v905 = vpop.f32.mrb[0].mxu0
    %v906 = vpop.f32.mrb[0].mxu0
    %v907 = vadd.f32 %v850, %v906
    %v908 = vpop.f32.mrb[0].mxu0
    %v909 = vpop.f32.mrb[0].mxu0
    %v910 = vadd.f32 %v853, %v909
    %911 = vmatprep.mubr.bf16.mxu0 0
    %912 = vmatmul.mubr.bf16.gmra.mrb[0].mxu0 %v517
    %v913 = vpop.f32.mrb[0].mxu0
    %v914 = vpop.f32.mrb[0].mxu0
    %v915 = vadd.f32 %v858, %v914
    %v916 = vpop.f32.mrb[0].mxu0
    %v917 = vpop.f32.mrb[0].mxu0
    %v918 = vadd.f32 %v861, %v917
    %919 = vdwg.mxu0
    %v920 = vld [vmem:[%s4] sm:$0x1]
    %v922 = vlaneseq
    %v923 = vshrl.u32 %v922, 7
    %v924 = vsub.s32 0, %v923
    %v925 = vrot.slane %v920, %v924
    %v927 = vadd.f32 %v898, %v925
    %v928 = vtanh.pop %v927
    %v929 = vmul.f32 %v928, %v928
    %930 = vadd.xlane.f32.xlu0 %v929
    %v931 = vpop.xlane.xlu0 %930
    %v932 = vtanh.pop %v902
    %v933 = vmul.f32 %v928, %v932
    %934 = vadd.xlane.f32.xlu0 %v933
    %v935 = vpop.xlane.xlu0 %934
    %v936 = vmul.f32 %v932, %v932
    %937 = vadd.xlane.f32.xlu0 %v936
    %v938 = vpop.xlane.xlu0 %937
    %v939 = vmul.f32 %v931, %v938
    %v940 = vmax.f32 %v939, 1e-12
    %v941 = vrsqrt.pop %v940
    %v942 = vmul.f32 %v935, %v941
    %v943 = vtanh.pop %v907
    %v944 = vmul.f32 %v928, %v943
    %945 = vadd.xlane.f32.xlu0 %v944
    %v946 = vpop.xlane.xlu0 %945
    %v947 = vmul.f32 %v943, %v943
    %948 = vadd.xlane.f32.xlu0 %v947
    %v949 = vpop.xlane.xlu0 %948
    %v950 = vmul.f32 %v931, %v949
    %v951 = vmax.f32 %v950, 1e-12
    %v952 = vrsqrt.pop %v951
    %v953 = vmul.f32 %v946, %v952
    %v954 = vtanh.pop %v910
    %v955 = vmul.f32 %v928, %v954
    %956 = vadd.xlane.f32.xlu0 %v955
    %v957 = vpop.xlane.xlu0 %956
    %v958 = vmul.f32 %v954, %v954
    %959 = vadd.xlane.f32.xlu0 %v958
    %v960 = vpop.xlane.xlu0 %959
    %v961 = vmul.f32 %v931, %v960
    %v962 = vmax.f32 %v961, 1e-12
    %v963 = vrsqrt.pop %v962
    %v964 = vmul.f32 %v957, %v963
    %v965 = vtanh.pop %v915
    %v966 = vmul.f32 %v928, %v965
    %967 = vadd.xlane.f32.xlu0 %v966
    %v968 = vpop.xlane.xlu0 %967
    %v969 = vmul.f32 %v965, %v965
    %970 = vadd.xlane.f32.xlu0 %v969
    %v971 = vpop.xlane.xlu0 %970
    %v972 = vmul.f32 %v931, %v971
    %v973 = vmax.f32 %v972, 1e-12
    %v974 = vrsqrt.pop %v973
    %v975 = vmul.f32 %v968, %v974
    %v976 = vtanh.pop %v918
    %v977 = vmul.f32 %v928, %v976
    %978 = vadd.xlane.f32.xlu0 %v977
    %v979 = vpop.xlane.xlu0 %978
    %v980 = vmul.f32 %v976, %v976
    %981 = vadd.xlane.f32.xlu0 %v980
    %v982 = vpop.xlane.xlu0 %981
    %v983 = vmul.f32 %v931, %v982
    %v984 = vmax.f32 %v983, 1e-12
    %v985 = vrsqrt.pop %v984
    %v986 = vmul.f32 %v979, %v985
    %v987 = vmax.f32 %v942, %v953
    %v988 = vmax.f32 %v987, %v964
    %v989 = vmax.f32 %v988, %v975
    %v990 = vmax.f32 %v989, %v986
    %v991 = vsub.f32 %v942, %v990
    %v992 = vmul.f32 %v991, 1.442695
    %v993 = vpow.pop %v992
    %v994 = vsub.f32 %v953, %v990
    %v995 = vmul.f32 %v994, 1.442695
    %v996 = vpow.pop %v995
    %v997 = vsub.f32 %v964, %v990
    %v998 = vmul.f32 %v997, 1.442695
    %v999 = vpow.pop %v998
    %v1000 = vsub.f32 %v975, %v990
    %v1001 = vmul.f32 %v1000, 1.442695
    %v1002 = vpow.pop %v1001
    %v1003 = vsub.f32 %v986, %v990
    %v1004 = vmul.f32 %v1003, 1.442695
    %v1005 = vpow.pop %v1004
    %v1006 = vadd.f32 %v993, %v996
    %v1007 = vadd.f32 %v1006, %v999
    %v1008 = vadd.f32 %v1007, %v1002
    %v1009 = vadd.f32 %v1008, %v1005
    %v1010 = vrcp.pop %v1009
    %v1011 = vmul.f32 1.0, %v1010
    %1012 = vst [vmem:[%s5] sm:$0xff] 0.0
    %v1013 = vmul.f32 %v993, %v1011
    %vm1014 = vcmask 7168
    %1015 = vst.msk [vmem:[%s5] sm:$0xff] %vm1014, %v1013
    %v1016 = vmul.f32 %v996, %v1011
    %vm1017 = vcmask 15368
    %1018 = vst.msk [vmem:[%s5] sm:$0xff] %vm1017, %v1016
    %v1019 = vmul.f32 %v999, %v1011
    %vm1020 = vcmask 23568
    %1021 = vst.msk [vmem:[%s5] sm:$0xff] %vm1020, %v1019
    %v1022 = vmul.f32 %v1002, %v1011
    %vm1023 = vcmask 31768
    %1024 = vst.msk [vmem:[%s5] sm:$0xff] %vm1023, %v1022
    %v1025 = vmul.f32 %v1005, %v1011
    %vm1026 = vcmask 39968
    %1027 = vst.msk [vmem:[%s5] sm:$0xff] %vm1026, %v1025
    // Predicated region
    $region30: #{zerodnn_forward.1} parent=1 // pred_check
      _
    $region31: #{zerodnn_forward.1} parent=1 // pred_check_branch
      %1029 = sbr.rel (0) target = $region33
    $region32: #{zerodnn_forward.1} parent=1 // pred_region
      _
    $region33: #{zerodnn_forward.1} parent=1 // pred_fallthru
      _
    // Predicated region
    $region34: #{zerodnn_forward.1} parent=1 // pred_check
      _
    $region35: #{zerodnn_forward.1} parent=1 // pred_check_branch
      %1031 = sbr.rel (0) target = $region37
    $region36: #{zerodnn_forward.1} parent=1 // pred_region
      _
    $region37: #{zerodnn_forward.1} parent=1 // pred_fallthru
      _
    %1032 = vsyncpa [#allocation3], 1
    %1033 = vsyncpa [#allocation5], 1

</llo_original>
